<compile_context>
chip_gen: v5e
topology: v5e:2x2
jax: 0.10.0
libtpu: 0.0.40
codegen_flags: <defaults>
</compile_context>

<pallas_src>
import math

import jax
import jax.numpy as jnp
from jax.experimental import pallas as pl
from jax.experimental.pallas import tpu as pltpu

_LANE = 128


def _rf_noise_kernel(sigmas_ref, clean_ref, noise_ref, out_ref):
    """One grid step = one (batch, row-tile) block.

    sigmas_ref: SMEM (B,) f32  -- scalar-prefetched per-batch sigmas
    clean_ref/noise_ref/out_ref: VMEM (1, tile_rows, 128) lane-dense tiles
    """
    b = pl.program_id(0)
    s = sigmas_ref[b]
    res = s * noise_ref[...].astype(jnp.float32) \
        + (1.0 - s) * clean_ref[...].astype(jnp.float32)
    out_ref[...] = res.astype(out_ref.dtype)


def minrf_noise_forward(clean_images, key, *, ln=True, stratisfied=False,
                        mode_scale=0.0, noise=None):
    B, C, H, W = clean_images.shape
    N = C * H * W
    dtype = clean_images.dtype
    itemsize = jnp.dtype(dtype).itemsize
    k_noise, k_sigma = jax.random.split(key)

    # torch.randn_like(img) per image  ->  one normal draw with image shape.
    if noise is None:
        noise = jax.random.normal(k_noise, clean_images.shape, dtype=dtype)

    # ---- sigma sampling (cheap glue, mirrors the PyTorch branches) ----
    if ln:
        if stratisfied:
            quantiles = jnp.linspace(0.0, 1.0, B + 1)[:-1]
            z = quantiles + jax.random.uniform(k_sigma, (B,)) / B
            z = jax.scipy.special.erfinv(2.0 * z - 1.0) * math.sqrt(2.0)
            sigmas = jax.nn.sigmoid(z)
        else:
            nt = jax.random.normal(k_sigma, (B,))
            sigmas = jax.nn.sigmoid(nt)
    else:
        sigmas = jax.random.uniform(k_sigma, (B,))
        if mode_scale != 0.0:
            sigmas = 1.0 - sigmas - mode_scale * (
                jnp.cos(math.pi * sigmas / 2.0) ** 2 - 1.0 + sigmas)
    sigmas = sigmas.astype(jnp.float32)

    # ---- lane/sublane-dense layout: (B, N) -> (B, R_pad, 128) ----
    sub = 8 if itemsize == 4 else (16 if itemsize == 2 else 32)  # sublane multiple
    R = pl.cdiv(N, _LANE)                                        # rows of 128 lanes

    # Target ~1 MiB per tile per buffer; round to a sublane multiple; cap at R.
    target_rows = max(sub, (1 << 20) // (_LANE * itemsize))
    tile_rows = min(target_rows, pl.cdiv(R, sub) * sub)
    tile_rows = max(sub, (tile_rows // sub) * sub)

    R_pad = pl.cdiv(R, tile_rows) * tile_rows
    N_pad = R_pad * _LANE

    clean_flat = clean_images.reshape(B, N)
    noise_flat = noise.reshape(B, N)
    if N_pad != N:
        pad = N_pad - N
        clean_flat = jnp.pad(clean_flat, ((0, 0), (0, pad)))
        noise_flat = jnp.pad(noise_flat, ((0, 0), (0, pad)))
    clean_3d = clean_flat.reshape(B, R_pad, _LANE)
    noise_3d = noise_flat.reshape(B, R_pad, _LANE)

    grid = (B, R_pad // tile_rows)
    blk = (1, tile_rows, _LANE)

    noised_3d = pl.pallas_call(
        _rf_noise_kernel,
        out_shape=jax.ShapeDtypeStruct((B, R_pad, _LANE), dtype),
        grid_spec=pltpu.PrefetchScalarGridSpec(
            num_scalar_prefetch=1,          # sigmas land in SMEM
            grid=grid,
            in_specs=[
                pl.BlockSpec(blk, lambda b, r, sig: (b, r, 0)),   # clean
                pl.BlockSpec(blk, lambda b, r, sig: (b, r, 0)),   # noise
            ],
            out_specs=pl.BlockSpec(blk, lambda b, r, sig: (b, r, 0)),
        ),
        compiler_params=pltpu.CompilerParams(
            dimension_semantics=("parallel", "parallel")),
    )(sigmas, clean_3d, noise_3d)

    noised_images = noised_3d.reshape(B, N_pad)[:, :N].reshape(B, C, H, W)

    # Mirrors the data_dict writes of the PyTorch module.
    return {
        "noised_images": noised_images,
        "flow_noise": noise,
        "sigmas": sigmas,
        "timesteps": sigmas,   # timesteps_write_key gets the same sigmas
    }


if __name__ == "__main__":
    key = jax.random.PRNGKey(0)
    k_img, k_fwd = jax.random.split(key)

    B, C, H, W = 2, 4, 16, 16
    clean = jax.random.normal(k_img, (B, C, H, W), dtype=jnp.float32)

    out = minrf_noise_forward(clean, k_fwd)
    jax.block_until_ready(out["noised_images"])

    # Reference check (plain JAX) of the lerp done inside the kernel.
    sig = out["sigmas"].reshape(B, 1, 1, 1)
    ref = sig * out["flow_noise"] + (1.0 - sig) * clean
    assert jnp.allclose(out["noised_images"], ref, atol=1e-6, rtol=1e-6)
    assert out["noised_images"].shape == (B, C, H, W)
    assert out["sigmas"].shape == (B,)

    print("KERNEL_OK")
</pallas_src>

<mosaic_0001>
module attributes {stable_mosaic.version = 11 : i64} {
  func.func @_rf_noise_kernel(%arg0: i32, %arg1: i32, %arg2: memref<2xf32, #tpu.memory_space<smem>>, %arg3: memref<1x8x128xf32, #tpu.memory_space<vmem>>, %arg4: memref<1x8x128xf32, #tpu.memory_space<vmem>>, %arg5: memref<1x8x128xf32, #tpu.memory_space<vmem>>) attributes {dimension_semantics = [#tpu.dimension_semantics<parallel>, #tpu.dimension_semantics<parallel>], iteration_bounds = array<i64: 2, 1>, scalar_prefetch = 1 : i64, scratch_operands = 0 : i64, tpu.core_type = #tpu.core_type<tc>, window_params = [{transform_indices = @transform_0, window_bounds = array<i64: 1, 8, 128>}, {transform_indices = @transform_1, window_bounds = array<i64: 1, 8, 128>}, {transform_indices = @transform_2, window_bounds = array<i64: 1, 8, 128>}]} {
    %0 = arith.index_cast %arg0 : i32 to index
    %1 = memref.load %arg2[%0] : memref<2xf32, #tpu.memory_space<smem>>
    %c0 = arith.constant 0 : index
    %c0_0 = arith.constant 0 : index
    %c0_1 = arith.constant 0 : index
    %2 = vector.load %arg4[%c0, %c0_0, %c0_1] : memref<1x8x128xf32, #tpu.memory_space<vmem>>, vector<1x8x128xf32>
    %3 = vector.broadcast %1 : f32 to vector<1x8x128xf32>
    %4 = arith.mulf %3, %2 : vector<1x8x128xf32>
    %cst = arith.constant 1.000000e+00 : f32
    %5 = arith.subf %cst, %1 : f32
    %c0_2 = arith.constant 0 : index
    %c0_3 = arith.constant 0 : index
    %c0_4 = arith.constant 0 : index
    %6 = vector.load %arg3[%c0_2, %c0_3, %c0_4] : memref<1x8x128xf32, #tpu.memory_space<vmem>>, vector<1x8x128xf32>
    %7 = vector.broadcast %5 : f32 to vector<1x8x128xf32>
    %8 = arith.mulf %7, %6 : vector<1x8x128xf32>
    %9 = arith.addf %4, %8 : vector<1x8x128xf32>
    %c0_5 = arith.constant 0 : index
    %c0_6 = arith.constant 0 : index
    %c0_7 = arith.constant 0 : index
    %10 = vector.load %arg5[%c0_5, %c0_6, %c0_7] : memref<1x8x128xf32, #tpu.memory_space<vmem>>, vector<1x8x128xf32>
    tpu.vector_store %arg5[%c0_5, %c0_6, %c0_7], %9 {strides = array<i32>} : memref<1x8x128xf32, #tpu.memory_space<vmem>>, vector<1x8x128xf32>,
    return
  }
  func.func @transform_0(%arg0: i32, %arg1: i32, %arg2: memref<2xf32, #tpu.memory_space<smem>>) -> (i32, i32, i32) {
    %c0_i32 = arith.constant 0 : i32
    %c0_i32_0 = arith.constant 0 : i32
    return %arg0, %arg1, %c0_i32 : i32, i32, i32
  }
  func.func @transform_1(%arg0: i32, %arg1: i32, %arg2: memref<2xf32, #tpu.memory_space<smem>>) -> (i32, i32, i32) {
    %c0_i32 = arith.constant 0 : i32
    %c0_i32_0 = arith.constant 0 : i32
    return %arg0, %arg1, %c0_i32 : i32, i32, i32
  }
  func.func @transform_2(%arg0: i32, %arg1: i32, %arg2: memref<2xf32, #tpu.memory_space<smem>>) -> (i32, i32, i32) {
    %c0_i32 = arith.constant 0 : i32
    %c0_i32_0 = arith.constant 0 : i32
    return %arg0, %arg1, %c0_i32 : i32, i32, i32
  }
}

</mosaic_0001>

<llo_original>
// kernel: tpu_custom_call.1
$region0: #{tpu_custom_call.1}
  #allocation0 [shape = 'u32[]', space=smem, size = 0x4, offset = 0x4, fixed_abs, tag = 'smem constant byte address 0x4 - core index']
  #allocation1 [shape = 'u32[72,128]{1,0:T(1,128)}', space=vmem, size = 0x9000, scoped, tag = 'internal scratch']
  #allocation2 [shape = 's32[1]{0}', space=sflag, size = 0x4, scoped, tag = 'scoped memory for tpu_custom_call.1']
  #allocation3 [shape = 'u8[512]{0}', space=smem, size = 0x200, scoped, tag = 'prefetched SMEM operand 0']
  %s0 = inlined_call_operand.hbm [shape: f32[2], index: 0, kind: input, shape index: {}]
  %s1 = inlined_call_operand.hbm [shape: f32[2,8,128], index: 1, kind: input, shape index: {}]
  %s2 = inlined_call_operand.hbm [shape: f32[2,8,128], index: 2, kind: input, shape index: {}]
  %s3 = inlined_call_operand.hbm [shape: f32[2,8,128], index: 3, kind: output, shape index: {}]
  %s4 = sld [smem:[#allocation0]]
  $region49: #{tpu_custom_call.1} parent=0
    _
  %s6 = ssub.s32 1, %s4
  %s7 = scalar_select 0, %s6, %s4
  %s9 = sshll.u32 %s0, 4
  %s10 = int_to_ptr.hbm [resolvable:$true] %s9
  %12 = dma.hbm_to_smem %s10, 16, [#allocation3], [#allocation2]
  %14 = dma.done [#allocation2], 16
  %15 = sfence
  $region1: #{tpu_custom_call.1} parent=0
    #allocation4 [shape = 'u8[8192]{0}', space=vmem, size = 0x2000, scoped, tag = 'input window, operand 1']
    #allocation5 [shape = 's32[2]{0}', space=sflag, size = 0x8, scoped, tag = 'scoped memory for tpu_custom_call.1']
    #allocation6 [shape = 's32[2]{0}', space=sflag, size = 0x8, scoped, tag = 'scoped memory for tpu_custom_call.1']
    #allocation7 [shape = 'u8[8192]{0}', space=vmem, size = 0x2000, scoped, tag = 'input window, operand 2']
    #allocation8 [shape = 's32[2]{0}', space=sflag, size = 0x8, scoped, tag = 'scoped memory for tpu_custom_call.1']
    #allocation9 [shape = 'u8[8192]{0}', space=vmem, size = 0x2000, scoped, tag = 'output window, operand 0']
    %16 = vsyncpa [#allocation5], 0
    %s17 = scalar_lea.sflag [#allocation5], 1
    %18 = vsyncpa %s17, 0
    %19 = vsyncpa [#allocation8], 0
    %s20 = scalar_lea.sflag [#allocation8], 1
    %21 = vsyncpa %s20, 0
    %22 = vsyncpa [#allocation6], 0
    %s23 = scalar_lea.sflag [#allocation6], 1
    %24 = vsyncpa %s23, 0
    loop: start=0, step=1, limit=4
    $region2: #{tpu_custom_call.1} parent=1 // loop_pre_header
      _
    $region3: #{tpu_custom_call.1} parent=1 // loop_header
      %s26 = sphi 0, %s30
      %p27 = scmp.ge.s32.totalorder %s26, 4
      %s33 = sphi 0, %s45
      %s34 = sphi 0, %s41
      %s35 = sphi 0, %s33
      %s36 = sphi 0, %s34
      %s37 = sphi 0, %s35
      %s38 = sphi 0, %s36
      %s50 = sphi 0, %s52
      %s53 = sphi 0, %s50
      %s54 = sphi 0, %s53
      %s70 = sphi 0, %s54
      %s78 = sphi 0, %s80
      %s81 = sphi 0, %s78
      %s82 = sphi 0, %s81
      %s98 = sphi 0, %s82
      %s106 = sphi 0, %s108
      %s109 = sphi 0, %s106
      %s110 = sphi 0, %s109
      %s126 = sphi 0, %s110
    $region4: #{tpu_custom_call.1} parent=1 // loop_header_branch
      %29 = sbr.rel (%p27) target = $region8
    $region5: #{tpu_custom_call.1} parent=1 // loop_body
      %s31 = ssub.s32 %s26, 1
      %s32 = ssub.s32 %s26, 2
      %s39 = sadd.s32 1, %s34
      %p40 = scmp.ge.s32.totalorder %s39, 1
      %s41 = scalar_select %p40, 0, %s39
      %s42 = sadd.s32 1, %s33
      %s43 = scalar_select %p40, %s42, %s33
      %p44 = scmp.ge.s32.totalorder %s43, 2
      %s45 = scalar_select %p44, 0, %s43
      %s46 = ssub.s32 %s33, %s45
      %s47 = ssub.s32 %s34, %s41
      %s48 = sor.u32 %s46, %s47
      %p49 = scmp.eq.s32.totalorder %s48, 0
      %s51 = sadd.s32 %s50, 1
      %s52 = scalar_select %p49, %s50, %s51
      %p55 = pneg %p49
      %p56 = scmp.eq.s32.totalorder %s26, 1
      %p57 = por %p55, %p56
      %p58 = scmp.ne.s32.totalorder %s50, %s53
      %p59 = scmp.eq.s32.totalorder %s26, 0
      %p60 = por %p58, %p59
      %p61 = scmp.ne.s32.totalorder %s50, %s53
      %p62 = scmp.eq.s32.totalorder %s31, 1
      %p63 = por %p61, %p62
      %p64 = scmp.ne.s32.totalorder %s53, %s54
      %p65 = scmp.eq.s32.totalorder %s31, 0
      %p66 = por %p64, %p65
      %p67 = scmp.ne.s32.totalorder %s53, %s54
      %p68 = scmp.eq.s32.totalorder %s32, 1
      %p69 = por %p67, %p68
      %p71 = scmp.ne.s32.totalorder %s54, %s70
      %p72 = scmp.eq.s32.totalorder %s32, 0
      %p73 = por %p71, %p72
      %s74 = ssub.s32 %s33, %s45
      %s75 = ssub.s32 %s34, %s41
      %s76 = sor.u32 %s74, %s75
      %p77 = scmp.eq.s32.totalorder %s76, 0
      %s79 = sadd.s32 %s78, 1
      %s80 = scalar_select %p77, %s78, %s79
      %p83 = pneg %p77
      %p84 = scmp.eq.s32.totalorder %s26, 1
      %p85 = por %p83, %p84
      %p86 = scmp.ne.s32.totalorder %s78, %s81
      %p87 = scmp.eq.s32.totalorder %s26, 0
      %p88 = por %p86, %p87
      %p89 = scmp.ne.s32.totalorder %s78, %s81
      %p90 = scmp.eq.s32.totalorder %s31, 1
      %p91 = por %p89, %p90
      %p92 = scmp.ne.s32.totalorder %s81, %s82
      %p93 = scmp.eq.s32.totalorder %s31, 0
      %p94 = por %p92, %p93
      %p95 = scmp.ne.s32.totalorder %s81, %s82
      %p96 = scmp.eq.s32.totalorder %s32, 1
      %p97 = por %p95, %p96
      %p99 = scmp.ne.s32.totalorder %s82, %s98
      %p100 = scmp.eq.s32.totalorder %s32, 0
      %p101 = por %p99, %p100
      %s102 = ssub.s32 %s33, %s45
      %s103 = ssub.s32 %s34, %s41
      %s104 = sor.u32 %s102, %s103
      %p105 = scmp.eq.s32.totalorder %s104, 0
      %s107 = sadd.s32 %s106, 1
      %s108 = scalar_select %p105, %s106, %s107
      %p111 = pneg %p105
      %p112 = scmp.eq.s32.totalorder %s26, 1
      %p113 = por %p111, %p112
      %p114 = scmp.ne.s32.totalorder %s106, %s109
      %p115 = scmp.eq.s32.totalorder %s26, 0
      %p116 = por %p114, %p115
      %p117 = scmp.ne.s32.totalorder %s106, %s109
      %p118 = scmp.eq.s32.totalorder %s31, 1
      %p119 = por %p117, %p118
      %p120 = scmp.ne.s32.totalorder %s109, %s110
      %p121 = scmp.eq.s32.totalorder %s31, 0
      %p122 = por %p120, %p121
      %p123 = scmp.ne.s32.totalorder %s109, %s110
      %p124 = scmp.eq.s32.totalorder %s32, 1
      %p125 = por %p123, %p124
      %p127 = scmp.ne.s32.totalorder %s110, %s126
      %p128 = scmp.eq.s32.totalorder %s32, 0
      %p129 = por %p127, %p128
      %p130 = scmp.le.s32.totalorder 1, %s26
      %p131 = scmp.lt.s32.totalorder %s26, 3
      %p132 = pnand %p130, %p131
      %p133 = pneg %p132
      // Predicated region
      $region9: #{tpu_custom_call.1} parent=5 // pred_check
        _
      $region10: #{tpu_custom_call.1} parent=5 // pred_check_branch
        %135 = sbr.rel (%p132) target = $region12
      $region11: #{tpu_custom_call.1} parent=5 // pred_region
        %s136 = ssub.s32 %s26, 1
      $region12: #{tpu_custom_call.1} parent=5 // pred_fallthru
        _
      %p137 = scmp.lt.s32.totalorder %s26, 2
      // Predicated region
      $region13: #{tpu_custom_call.1} parent=5 // pred_check
        %p138 = pneg %p137
      $region14: #{tpu_custom_call.1} parent=5 // pred_check_branch
        %140 = sbr.rel (%p138) target = $region16
      $region15: #{tpu_custom_call.1} parent=5 // pred_region
        // Predicated region
        $region17: #{tpu_custom_call.1} parent=15 // pred_check
          %p141 = pneg %p60
        $region18: #{tpu_custom_call.1} parent=15 // pred_check_branch
          %143 = sbr.rel (%p141) target = $region20
        $region19: #{tpu_custom_call.1} parent=15 // pred_region
          %s144 = sand.u32 %s50, 1
          %s145 = scalar_lea.sflag [#allocation5], %s144
          %s146 = sand.u32 %s50, 1
          %s147 = smul.addr %s146, 8
          %s148 = scalar_lea.vmem [#allocation4], %s147
          %150 = vsyncadd %s145, 0
          %s151 = sadd.s32 %s34, %s33
          %s152 = smul.addr %s151, 8
          %s153 = scalar_lea.hbm %s1, %s152
          %s155 = sshll.u32 %s153, 4
          %s156 = int_to_ptr.hbm [resolvable:$true] %s155
          %s157 = sshll.u32 %s148, 4
          %s158 = int_to_ptr.vmem [resolvable:$true] %s157
          %160 = dma.hbm_to_vmem [thread:$0]  %s156, 128, %s158, %s145
        $region20: #{tpu_custom_call.1} parent=15 // pred_fallthru
          _
        // Predicated region
        $region21: #{tpu_custom_call.1} parent=15 // pred_check
          %p161 = pneg %p88
        $region22: #{tpu_custom_call.1} parent=15 // pred_check_branch
          %163 = sbr.rel (%p161) target = $region24
        $region23: #{tpu_custom_call.1} parent=15 // pred_region
          %s164 = sand.u32 %s78, 1
          %s165 = scalar_lea.sflag [#allocation8], %s164
          %s166 = sand.u32 %s78, 1
          %s167 = smul.addr %s166, 8
          %s168 = scalar_lea.vmem [#allocation7], %s167
          %170 = vsyncadd %s165, 0
          %s171 = sadd.s32 %s34, %s33
          %s172 = smul.addr %s171, 8
          %s173 = scalar_lea.hbm %s2, %s172
          %s175 = sshll.u32 %s173, 4
          %s176 = int_to_ptr.hbm [resolvable:$true] %s175
          %s177 = sshll.u32 %s168, 4
          %s178 = int_to_ptr.vmem [resolvable:$true] %s177
          %180 = dma.hbm_to_vmem [thread:$0]  %s176, 128, %s178, %s165
        $region24: #{tpu_custom_call.1} parent=15 // pred_fallthru
          _
      $region16: #{tpu_custom_call.1} parent=5 // pred_fallthru
        _
      %p181 = scmp.le.s32.totalorder 1, %s26
      %p182 = scmp.lt.s32.totalorder %s26, 3
      %p183 = pnand %p181, %p182
      %p184 = pneg %p183
      // Predicated region
      $region25: #{tpu_custom_call.1} parent=5 // pred_check
        _
      $region26: #{tpu_custom_call.1} parent=5 // pred_check_branch
        %186 = sbr.rel (%p183) target = $region28
      $region27: #{tpu_custom_call.1} parent=5 // pred_region
        %s187 = ssub.s32 %s26, 1
        %s188 = sand.u32 %s53, 1
        %s189 = scalar_lea.sflag [#allocation5], %s188
        %s190 = sand.u32 %s53, 1
        %s191 = smul.addr %s190, 8
        %s192 = scalar_lea.vmem [#allocation4], %s191
        // Predicated region
        $region29: #{tpu_custom_call.1} parent=27 // pred_check
          %p193 = pneg %p66
        $region30: #{tpu_custom_call.1} parent=27 // pred_check_branch
          %195 = sbr.rel (%p193) target = $region32
        $region31: #{tpu_custom_call.1} parent=27 // pred_region
          %197 = dma.done %s189, 128
        $region32: #{tpu_custom_call.1} parent=27 // pred_fallthru
          _
        %s198 = sand.u32 %s81, 1
        %s199 = scalar_lea.sflag [#allocation8], %s198
        %s200 = sand.u32 %s81, 1
        %s201 = smul.addr %s200, 8
        %s202 = scalar_lea.vmem [#allocation7], %s201
        // Predicated region
        $region33: #{tpu_custom_call.1} parent=27 // pred_check
          %p203 = pneg %p94
        $region34: #{tpu_custom_call.1} parent=27 // pred_check_branch
          %205 = sbr.rel (%p203) target = $region36
        $region35: #{tpu_custom_call.1} parent=27 // pred_region
          %207 = dma.done %s199, 128
        $region36: #{tpu_custom_call.1} parent=27 // pred_fallthru
          _
        %s208 = sand.u32 %s53, 1
        %s209 = scalar_lea.sflag [#allocation5], %s208
        %s210 = sand.u32 %s53, 1
        %s211 = smul.addr %s210, 8
        %s212 = scalar_lea.vmem [#allocation4], %s211
        %p213 = pneg %p66
        %p214 = pneg %p63
        %s215 = sand.u32 %s81, 1
        %s216 = scalar_lea.sflag [#allocation8], %s215
        %s217 = sand.u32 %s81, 1
        %s218 = smul.addr %s217, 8
        %s219 = scalar_lea.vmem [#allocation7], %s218
        %p220 = pneg %p94
        %p221 = pneg %p91
        %p222 = pneg %p122
        %p223 = pneg %p119
        %s224 = sand.u32 %s109, 1
        %s225 = scalar_lea.sflag [#allocation6], %s224
        %s226 = sand.u32 %s109, 1
        %s227 = smul.addr %s226, 8
        %s228 = scalar_lea.vmem [#allocation9], %s227
        %s229 = sld [smem:[#allocation3 + %s35]]
        %v230 = vld [vmem:[%s202] sm:$0xff]
        %v231 = vstv %s229
        %v232 = vmul.f32 %v231, %v230
        %s233 = ssub.f32 1.0, %s229
        %v234 = vld [vmem:[%s192] sm:$0xff]
        %v235 = vstv %s233
        %v236 = vmul.f32 %v235, %v234
        %v237 = vadd.f32 %v232, %v236
        %238 = vst [vmem:[%s228] sm:$0xff] %v237
        %s239 = sand.u32 %s109, 1
        %s240 = scalar_lea.sflag [#allocation6], %s239
        %s241 = sand.u32 %s109, 1
        %s242 = smul.addr %s241, 8
        %s243 = scalar_lea.vmem [#allocation9], %s242
        // Predicated region
        $region37: #{tpu_custom_call.1} parent=27 // pred_check
          %p244 = pneg %p119
        $region38: #{tpu_custom_call.1} parent=27 // pred_check_branch
          %246 = sbr.rel (%p244) target = $region40
        $region39: #{tpu_custom_call.1} parent=27 // pred_region
          %248 = vsyncadd %s240, 0
          %s249 = sadd.s32 %s36, %s35
          %s250 = smul.addr %s249, 8
          %s251 = scalar_lea.hbm %s3, %s250
          %s253 = sshll.u32 %s243, 4
          %s254 = int_to_ptr.vmem [resolvable:$true] %s253
          %s255 = sshll.u32 %s251, 4
          %s256 = int_to_ptr.hbm [resolvable:$true] %s255
          %258 = dma.vmem_to_hbm [thread:$0]  %s254, 128, %s256, %s240
        $region40: #{tpu_custom_call.1} parent=27 // pred_fallthru
          _
      $region28: #{tpu_custom_call.1} parent=5 // pred_fallthru
        _
      %p259 = scmp.le.s32.totalorder 2, %s26
      // Predicated region
      $region41: #{tpu_custom_call.1} parent=5 // pred_check
        %p260 = pneg %p259
      $region42: #{tpu_custom_call.1} parent=5 // pred_check_branch
        %262 = sbr.rel (%p260) target = $region44
      $region43: #{tpu_custom_call.1} parent=5 // pred_region
        %s263 = ssub.s32 %s26, 2
        // Predicated region
        $region45: #{tpu_custom_call.1} parent=43 // pred_check
          %p264 = pneg %p125
        $region46: #{tpu_custom_call.1} parent=43 // pred_check_branch
          %266 = sbr.rel (%p264) target = $region48
        $region47: #{tpu_custom_call.1} parent=43 // pred_region
          %s267 = sand.u32 %s110, 1
          %s268 = scalar_lea.sflag [#allocation6], %s267
          %s269 = sand.u32 %s110, 1
          %s270 = smul.addr %s269, 8
          %s271 = scalar_lea.vmem [#allocation9], %s270
          %273 = dma.done %s268, 128
        $region48: #{tpu_custom_call.1} parent=43 // pred_fallthru
          _
      $region44: #{tpu_custom_call.1} parent=5 // pred_fallthru
        _
    $region6: #{tpu_custom_call.1} parent=1 // loop_footer
      %s30 = sadd.s32 1, %s26
    $region7: #{tpu_custom_call.1} parent=1 // loop_footer_branch
      %25 = sbr.rel target = $region3
    $region8: #{tpu_custom_call.1} parent=1 // loop_exit
      _
    %274 = vsyncpa [#allocation5], 1
    %s275 = scalar_lea.sflag [#allocation5], 1
    %276 = vsyncpa %s275, 1
    %277 = vsyncpa [#allocation8], 1
    %s278 = scalar_lea.sflag [#allocation8], 1
    %279 = vsyncpa %s278, 1
    %280 = vsyncpa [#allocation6], 1
    %s281 = scalar_lea.sflag [#allocation6], 1
    %282 = vsyncpa %s281, 1

</llo_original>
